<compile_context>
chip_gen: v6e
topology: v6e:2x2x1
jax: 0.10.0
libtpu: 0.0.40
codegen_flags: <defaults>
</compile_context>

<pallas_src>
import functools

import jax
import jax.numpy as jnp
from jax import lax
from jax.experimental import pallas as pl
from jax.experimental.pallas import tpu as pltpu

_GELU_C = 0.7978845608028654  # sqrt(2/pi)


def _round_up(x, m):
    return ((x + m - 1) // m) * m


def _ffn_kernel(x_ref, w1_ref, b1_ref, w2_ref, b2_ref, o_ref):
    # x_ref: (TM, D)   w1_ref: (D, H)   b1_ref: (1, H)
    # w2_ref: (H, D)   b2_ref: (1, D)   o_ref: (TM, D)
    x = x_ref[...]

    # ---- Linear 1 (MXU, f32 accumulation) ----
    h = jnp.dot(x, w1_ref[...], preferred_element_type=jnp.float32)
    h = h + b1_ref[...].astype(jnp.float32)

    # ---- GELU (tanh approximation), kept in f32 on VPU/EUP ----
    g = 0.5 * h * (1.0 + jnp.tanh(_GELU_C * (h + 0.044715 * (h * h * h))))
    g = g.astype(w2_ref.dtype)

    # ---- Linear 2 (MXU, f32 accumulation) ----
    y = jnp.dot(g, w2_ref[...], preferred_element_type=jnp.float32)
    y = y + b2_ref[...].astype(jnp.float32)

    o_ref[...] = y.astype(o_ref.dtype)


def chunk_feedforward(x, w1, b1, w2, b2, *, chunks=1, along_dim=1,
                      block_rows=1024, compute_dtype=None):
    """Chunk(chunks, FeedForward, along_dim=1) forward.

    x : (B, S, D)
    w1: (H, D)  torch nn.Linear layout (out_features, in_features)
    b1: (H,)
    w2: (D, H)
    b2: (D,)
    chunks / along_dim: kept for interface fidelity with the PyTorch module.
        Since FeedForward is position-wise, chunk->fn->concat == fn(x), which
        is what the row-tiled kernel computes (each grid tile is a "chunk").
    compute_dtype: e.g. jnp.bfloat16 to halve HBM traffic (f32 accumulation
        is always used on the MXU).
    """
    assert chunks >= 1
    assert along_dim in (1, -2), "Performer uses along_dim=1 (sequence axis)"
    B, S, D = x.shape
    H, D_in = w1.shape
    assert D_in == D and w2.shape == (D, H)

    if compute_dtype is None:
        compute_dtype = x.dtype

    rows = B * S
    x2 = x.reshape(rows, D).astype(compute_dtype)
    w1_t = w1.T.astype(compute_dtype)            # (D, H)
    w2_t = w2.T.astype(compute_dtype)            # (H, D)
    b1_2 = b1.reshape(1, H).astype(jnp.float32)
    b2_2 = b2.reshape(1, D).astype(jnp.float32)

    # Pick an effective row tile: big (default 1024) for bandwidth, but never
    # bigger than needed, and always a multiple of 8 (sublane).
    block = max(8, min(_round_up(block_rows, 8), _round_up(rows, 8)))
    padded_rows = _round_up(rows, block)
    if padded_rows != rows:
        # Tail handling: pad rows (padded rows are discarded after the call).
        x2 = jnp.pad(x2, ((0, padded_rows - rows), (0, 0)))
    grid = padded_rows // block

    out2 = pl.pallas_call(
        _ffn_kernel,
        out_shape=jax.ShapeDtypeStruct((padded_rows, D), compute_dtype),
        grid_spec=pltpu.PrefetchScalarGridSpec(
            num_scalar_prefetch=0,
            grid=(grid,),
            in_specs=[
                pl.BlockSpec((block, D), lambda i: (i, 0)),   # x row tile
                pl.BlockSpec((D, H), lambda i: (0, 0)),       # W1^T (resident)
                pl.BlockSpec((1, H), lambda i: (0, 0)),       # b1   (resident)
                pl.BlockSpec((H, D), lambda i: (0, 0)),       # W2^T (resident)
                pl.BlockSpec((1, D), lambda i: (0, 0)),       # b2   (resident)
            ],
            out_specs=pl.BlockSpec((block, D), lambda i: (i, 0)),
        ),
        compiler_params=pltpu.CompilerParams(
            dimension_semantics=("parallel",)),
    )(x2, w1_t, b1_2, w2_t, b2_2)

    return out2[:rows].reshape(B, S, D)


# ----------------------------- reference -----------------------------------
def _ff_ref(x, w1, b1, w2, b2):
    h = x @ w1.T + b1
    g = 0.5 * h * (1.0 + jnp.tanh(_GELU_C * (h + 0.044715 * h ** 3)))
    return g @ w2.T + b2


def _chunk_ref(x, w1, b1, w2, b2, chunks, along_dim=1):
    """Literal Chunk.forward semantics (torch .chunk sizes: ceil, last smaller)."""
    if chunks == 1:
        return _ff_ref(x, w1, b1, w2, b2)
    S = x.shape[along_dim]
    size = -(-S // chunks)
    pieces = []
    for start in range(0, S, size):
        stop = min(start + size, S)
        c = lax.slice_in_dim(x, start, stop, axis=along_dim)
        pieces.append(_ff_ref(c, w1, b1, w2, b2))
    return jnp.concatenate(pieces, axis=along_dim)


if __name__ == "__main__":
    key = jax.random.PRNGKey(0)
    kx, kw1, kb1, kw2, kb2, kx2 = jax.random.split(key, 6)

    # Small shapes consistent with the module: batch=2, seq=8, dim=128, hidden=4*dim.
    B, S, D = 2, 8, 128
    H = 4 * D
    chunks = 2

    x = jax.random.normal(kx, (B, S, D), dtype=jnp.float32)
    w1 = 0.02 * jax.random.normal(kw1, (H, D), dtype=jnp.float32)
    b1 = 0.02 * jax.random.normal(kb1, (H,), dtype=jnp.float32)
    w2 = 0.02 * jax.random.normal(kw2, (D, H), dtype=jnp.float32)
    b2 = 0.02 * jax.random.normal(kb2, (D,), dtype=jnp.float32)

    # --- f32 path ---
    out = chunk_feedforward(x, w1, b1, w2, b2, chunks=chunks)
    out = jax.block_until_ready(out)
    ref = _chunk_ref(x, w1, b1, w2, b2, chunks)
    assert out.shape == (B, S, D)
    assert jnp.allclose(out, ref, atol=1e-4, rtol=1e-4), "f32 mismatch vs reference"

    # --- f32 path, ragged seq (exercises tail padding + uneven torch-style chunks) ---
    S2, chunks2 = 20, 3
    x2 = jax.random.normal(kx2, (B, S2, D), dtype=jnp.float32)
    out2 = chunk_feedforward(x2, w1, b1, w2, b2, chunks=chunks2, block_rows=16)
    out2 = jax.block_until_ready(out2)
    ref2 = _chunk_ref(x2, w1, b1, w2, b2, chunks2)
    assert jnp.allclose(out2, ref2, atol=1e-4, rtol=1e-4), "ragged mismatch vs reference"

    # --- bf16 compute path (half the HBM traffic; f32 MXU accumulation) ---
    out_bf16 = chunk_feedforward(x, w1, b1, w2, b2, chunks=chunks,
                                 compute_dtype=jnp.bfloat16)
    out_bf16 = jax.block_until_ready(out_bf16)
    assert jnp.allclose(out_bf16.astype(jnp.float32), ref, atol=3e-2, rtol=3e-2), \
        "bf16 mismatch vs reference"

    print("KERNEL_OK")
</pallas_src>

<mosaic_0001>
module attributes {stable_mosaic.version = 11 : i64} {
  func.func @_ffn_kernel(%arg0: i32, %arg1: memref<16x128xf32, #tpu.memory_space<vmem>>, %arg2: memref<128x512xf32, #tpu.memory_space<vmem>>, %arg3: memref<1x512xf32, #tpu.memory_space<vmem>>, %arg4: memref<512x128xf32, #tpu.memory_space<vmem>>, %arg5: memref<1x128xf32, #tpu.memory_space<vmem>>, %arg6: memref<16x128xf32, #tpu.memory_space<vmem>>) attributes {dimension_semantics = [#tpu.dimension_semantics<parallel>], iteration_bounds = array<i64: 1>, scalar_prefetch = 0 : i64, scratch_operands = 0 : i64, tpu.core_type = #tpu.core_type<tc>, window_params = [{transform_indices = @transform_0, window_bounds = array<i64: 16, 128>}, {pipeline_mode = #tpu.pipeline_mode<synchronous>, transform_indices = @transform_1, window_bounds = array<i64: 128, 512>}, {pipeline_mode = #tpu.pipeline_mode<synchronous>, transform_indices = @transform_2, window_bounds = array<i64: 1, 512>}, {pipeline_mode = #tpu.pipeline_mode<synchronous>, transform_indices = @transform_3, window_bounds = array<i64: 512, 128>}, {pipeline_mode = #tpu.pipeline_mode<synchronous>, transform_indices = @transform_4, window_bounds = array<i64: 1, 128>}, {transform_indices = @transform_5, window_bounds = array<i64: 16, 128>}]} {
    %c0 = arith.constant 0 : index
    %c0_0 = arith.constant 0 : index
    %0 = vector.load %arg1[%c0, %c0_0] : memref<16x128xf32, #tpu.memory_space<vmem>>, vector<16x128xf32>
    %c0_1 = arith.constant 0 : index
    %c0_2 = arith.constant 0 : index
    %1 = vector.load %arg2[%c0_1, %c0_2] : memref<128x512xf32, #tpu.memory_space<vmem>>, vector<128x512xf32>
    %cst = arith.constant dense<0.000000e+00> : vector<16x512xf32>
    %2 = tpu.matmul %0, %1, %cst {dimension_numbers = #tpu.dot_dimension_numbers<[1], [0], [0], [1], [0, 0, 1, 1], [], []>} : vector<16x128xf32>, vector<128x512xf32>, vector<16x512xf32> -> vector<16x512xf32>
    %c0_3 = arith.constant 0 : index
    %c0_4 = arith.constant 0 : index
    %3 = vector.load %arg3[%c0_3, %c0_4] : memref<1x512xf32, #tpu.memory_space<vmem>>, vector<1x512xf32>
    %4 = vector.broadcast %3 : vector<1x512xf32> to vector<16x512xf32>
    %5 = arith.addf %2, %4 : vector<16x512xf32>
    %cst_5 = arith.constant 5.000000e-01 : f32
    %6 = vector.broadcast %cst_5 : f32 to vector<16x512xf32>
    %7 = arith.mulf %6, %5 : vector<16x512xf32>
    %8 = arith.mulf %5, %5 : vector<16x512xf32>
    %9 = arith.mulf %8, %5 : vector<16x512xf32>
    %cst_6 = arith.constant 4.471500e-02 : f32
    %10 = vector.broadcast %cst_6 : f32 to vector<16x512xf32>
    %11 = arith.mulf %10, %9 : vector<16x512xf32>
    %12 = arith.addf %5, %11 : vector<16x512xf32>
    %cst_7 = arith.constant 0.797884583 : f32
    %13 = vector.broadcast %cst_7 : f32 to vector<16x512xf32>
    %14 = arith.mulf %13, %12 : vector<16x512xf32>
    %15 = math.tanh %14 : vector<16x512xf32>
    %cst_8 = arith.constant 1.000000e+00 : f32
    %16 = vector.broadcast %cst_8 : f32 to vector<16x512xf32>
    %17 = arith.addf %16, %15 : vector<16x512xf32>
    %18 = arith.mulf %7, %17 : vector<16x512xf32>
    %c0_9 = arith.constant 0 : index
    %c0_10 = arith.constant 0 : index
    %19 = vector.load %arg4[%c0_9, %c0_10] : memref<512x128xf32, #tpu.memory_space<vmem>>, vector<512x128xf32>
    %cst_11 = arith.constant dense<0.000000e+00> : vector<16x128xf32>
    %20 = tpu.matmul %18, %19, %cst_11 {dimension_numbers = #tpu.dot_dimension_numbers<[1], [0], [0], [1], [0, 0, 1, 1], [], []>} : vector<16x512xf32>, vector<512x128xf32>, vector<16x128xf32> -> vector<16x128xf32>
    %c0_12 = arith.constant 0 : index
    %c0_13 = arith.constant 0 : index
    %21 = vector.load %arg5[%c0_12, %c0_13] : memref<1x128xf32, #tpu.memory_space<vmem>>, vector<1x128xf32>
    %22 = vector.broadcast %21 : vector<1x128xf32> to vector<16x128xf32>
    %23 = arith.addf %20, %22 : vector<16x128xf32>
    %c0_14 = arith.constant 0 : index
    %c0_15 = arith.constant 0 : index
    %24 = vector.load %arg6[%c0_14, %c0_15] : memref<16x128xf32, #tpu.memory_space<vmem>>, vector<16x128xf32>
    tpu.vector_store %arg6[%c0_14, %c0_15], %23 {strides = array<i32>} : memref<16x128xf32, #tpu.memory_space<vmem>>, vector<16x128xf32>,
    return
  }
  func.func @transform_0(%arg0: i32) -> (i32, i32) {
    %c0_i32 = arith.constant 0 : i32
    %c0_i32_0 = arith.constant 0 : i32
    return %arg0, %c0_i32 : i32, i32
  }
  func.func @transform_1(%arg0: i32) -> (i32, i32) {
    %c0_i32 = arith.constant 0 : i32
    %c0_i32_0 = arith.constant 0 : i32
    %c0_i32_1 = arith.constant 0 : i32
    return %c0_i32, %c0_i32_0 : i32, i32
  }
  func.func @transform_2(%arg0: i32) -> (i32, i32) {
    %c0_i32 = arith.constant 0 : i32
    %c0_i32_0 = arith.constant 0 : i32
    %c0_i32_1 = arith.constant 0 : i32
    return %c0_i32, %c0_i32_0 : i32, i32
  }
  func.func @transform_3(%arg0: i32) -> (i32, i32) {
    %c0_i32 = arith.constant 0 : i32
    %c0_i32_0 = arith.constant 0 : i32
    %c0_i32_1 = arith.constant 0 : i32
    return %c0_i32, %c0_i32_0 : i32, i32
  }
  func.func @transform_4(%arg0: i32) -> (i32, i32) {
    %c0_i32 = arith.constant 0 : i32
    %c0_i32_0 = arith.constant 0 : i32
    %c0_i32_1 = arith.constant 0 : i32
    return %c0_i32, %c0_i32_0 : i32, i32
  }
  func.func @transform_5(%arg0: i32) -> (i32, i32) {
    %c0_i32 = arith.constant 0 : i32
    %c0_i32_0 = arith.constant 0 : i32
    return %arg0, %c0_i32 : i32, i32
  }
}

</mosaic_0001>

<llo_original>
// kernel: tpu_custom_call.1
$region0: #{tpu_custom_call.1}
  #allocation0 [shape = 'u32[]', space=smem, size = 0x4, offset = 0x4, fixed_abs, tag = 'smem constant byte address 0x4 - core index']
  #allocation1 [shape = 'u32[144,128]{1,0:T(1,128)}', space=vmem, size = 0x12000, scoped, tag = 'internal scratch']
  %s0 = inlined_call_operand.hbm [shape: f32[16,128], index: 0, kind: input, shape index: {}]
  %s1 = inlined_call_operand.hbm [shape: f32[128,512], index: 1, kind: input, shape index: {}]
  %s2 = inlined_call_operand.hbm [shape: f32[1,512], index: 2, kind: input, shape index: {}]
  %s3 = inlined_call_operand.hbm [shape: f32[512,128], index: 3, kind: input, shape index: {}]
  %s4 = inlined_call_operand.vmem [shape: f32[1,128], index: 4, kind: input, shape index: {}]
  %s5 = inlined_call_operand.hbm [shape: f32[16,128], index: 5, kind: output, shape index: {}]
  %s6 = sld [smem:[#allocation0]]
  $region46: #{tpu_custom_call.1} parent=0
    _
  %s8 = ssub.s32 1, %s6
  %s9 = scalar_select 0, %s8, %s6
  $region1: #{tpu_custom_call.1} parent=0
    #allocation2 [shape = 'u8[8192]{0}', space=vmem, size = 0x2000, scoped, tag = 'input window, operand 0, single buffered']
    #allocation3 [shape = 's32[1]{0}', space=sflag, size = 0x4, scoped, tag = 'scoped memory for tpu_custom_call.1']
    #allocation4 [shape = 's32[1]{0}', space=sflag, size = 0x4, scoped, tag = 'scoped memory for tpu_custom_call.1']
    #allocation5 [shape = 'u8[262144]{0}', space=vmem, size = 0x40000, scoped, tag = 'input window, operand 1, single buffered']
    #allocation6 [shape = 's32[1]{0}', space=sflag, size = 0x4, scoped, tag = 'scoped memory for tpu_custom_call.1']
    #allocation7 [shape = 'u8[2048]{0}', space=vmem, size = 0x800, scoped, tag = 'input window, operand 2, single buffered']
    #allocation8 [shape = 'u8[262144]{0}', space=vmem, size = 0x40000, scoped, tag = 'input window, operand 3, single buffered']
    #allocation9 [shape = 's32[1]{0}', space=sflag, size = 0x4, scoped, tag = 'scoped memory for tpu_custom_call.1']
    #allocation10 [shape = 'u8[8192]{0}', space=vmem, size = 0x2000, scoped, tag = 'output window, operand 0, single buffered']
    %10 = vsyncpa [#allocation3], 0
    %11 = vsyncpa [#allocation6], 0
    %12 = vsyncpa [#allocation9], 0
    %13 = vsyncpa [#allocation4], 0
    // Predicated region
    $region2: #{tpu_custom_call.1} parent=1 // pred_check
      _
    $region3: #{tpu_custom_call.1} parent=1 // pred_check_branch
      %15 = sbr.rel (0) target = $region5
    $region4: #{tpu_custom_call.1} parent=1 // pred_region
      %s17 = ssub.s32 256, 256
      %18 = vsyncadd [#allocation3], %s17
      %s19 = sshll.u32 [#allocation2], 4
      %s20 = int_to_ptr.vmem [resolvable:$true] %s19
      %25 = dma.hbm_to_vmem [thread:$0]  %s0, 256, %s20, [#allocation3], 128, 128, 8
    $region5: #{tpu_custom_call.1} parent=1 // pred_fallthru
      _
    // Predicated region
    $region6: #{tpu_custom_call.1} parent=1 // pred_check
      _
    $region7: #{tpu_custom_call.1} parent=1 // pred_check_branch
      %27 = sbr.rel (0) target = $region9
    $region8: #{tpu_custom_call.1} parent=1 // pred_region
      %s29 = ssub.s32 8192, 8192
      %30 = vsyncadd [#allocation6], %s29
      %s31 = sshll.u32 [#allocation5], 4
      %s32 = int_to_ptr.vmem [resolvable:$true] %s31
      %37 = dma.hbm_to_vmem [thread:$0]  %s1, 8192, %s32, [#allocation6], 512, 512, 32
    $region9: #{tpu_custom_call.1} parent=1 // pred_fallthru
      _
    // Predicated region
    $region10: #{tpu_custom_call.1} parent=1 // pred_check
      _
    $region11: #{tpu_custom_call.1} parent=1 // pred_check_branch
      %39 = sbr.rel (0) target = $region13
    $region12: #{tpu_custom_call.1} parent=1 // pred_region
      %s41 = ssub.s32 64, 64
      %42 = vsyncadd [#allocation6], %s41
      %s44 = sshll.u32 [#allocation7], 4
      %s45 = int_to_ptr.vmem [resolvable:$true] %s44
      %47 = dma.hbm_to_vmem [thread:$0]  %s2, 64, %s45, [#allocation6]
    $region13: #{tpu_custom_call.1} parent=1 // pred_fallthru
      _
    // Predicated region
    $region14: #{tpu_custom_call.1} parent=1 // pred_check
      _
    $region15: #{tpu_custom_call.1} parent=1 // pred_check_branch
      %49 = sbr.rel (0) target = $region17
    $region16: #{tpu_custom_call.1} parent=1 // pred_region
      %s51 = ssub.s32 8192, 8192
      %52 = vsyncadd [#allocation9], %s51
      %s53 = sshll.u32 [#allocation8], 4
      %s54 = int_to_ptr.vmem [resolvable:$true] %s53
      %59 = dma.hbm_to_vmem [thread:$0]  %s3, 8192, %s54, [#allocation9], 128, 128, 8
    $region17: #{tpu_custom_call.1} parent=1 // pred_fallthru
      _
    // Predicated region
    $region18: #{tpu_custom_call.1} parent=1 // pred_check
      _
    $region19: #{tpu_custom_call.1} parent=1 // pred_check_branch
      %61 = sbr.rel (0) target = $region21
    $region20: #{tpu_custom_call.1} parent=1 // pred_region
      _
    $region21: #{tpu_custom_call.1} parent=1 // pred_fallthru
      _
    // Predicated region
    $region22: #{tpu_custom_call.1} parent=1 // pred_check
      _
    $region23: #{tpu_custom_call.1} parent=1 // pred_check_branch
      %63 = sbr.rel (0) target = $region25
    $region24: #{tpu_custom_call.1} parent=1 // pred_region
      %64 = dma.done [#allocation3], 256
    $region25: #{tpu_custom_call.1} parent=1 // pred_fallthru
      _
    // Predicated region
    $region26: #{tpu_custom_call.1} parent=1 // pred_check
      _
    $region27: #{tpu_custom_call.1} parent=1 // pred_check_branch
      %66 = sbr.rel (0) target = $region29
    $region28: #{tpu_custom_call.1} parent=1 // pred_region
      %67 = dma.done [#allocation6], 8192
    $region29: #{tpu_custom_call.1} parent=1 // pred_fallthru
      _
    // Predicated region
    $region30: #{tpu_custom_call.1} parent=1 // pred_check
      _
    $region31: #{tpu_custom_call.1} parent=1 // pred_check_branch
      %69 = sbr.rel (0) target = $region33
    $region32: #{tpu_custom_call.1} parent=1 // pred_region
      %70 = dma.done [#allocation6], 64
    $region33: #{tpu_custom_call.1} parent=1 // pred_fallthru
      _
    // Predicated region
    $region34: #{tpu_custom_call.1} parent=1 // pred_check
      _
    $region35: #{tpu_custom_call.1} parent=1 // pred_check_branch
      %72 = sbr.rel (0) target = $region37
    $region36: #{tpu_custom_call.1} parent=1 // pred_region
      %73 = dma.done [#allocation9], 8192
    $region37: #{tpu_custom_call.1} parent=1 // pred_fallthru
      _
    %v74 = vld [vmem:[#allocation2] sm:$0xff]
    %v75 = vld [vmem:[#allocation2 + $0x8] sm:$0xff]
    %v76 = vld [vmem:[#allocation5] sm:$0xff]
    %v77 = vld [vmem:[#allocation5 + $0x8] sm:$0xff]
    %v78 = vld [vmem:[#allocation5 + $0x10] sm:$0xff]
    %v79 = vld [vmem:[#allocation5 + $0x18] sm:$0xff]
    %v80 = vld [vmem:[#allocation5 + $0x20] sm:$0xff]
    %v81 = vld [vmem:[#allocation5 + $0x28] sm:$0xff]
    %v82 = vld [vmem:[#allocation5 + $0x30] sm:$0xff]
    %v83 = vld [vmem:[#allocation5 + $0x38] sm:$0xff]
    %v84 = vld [vmem:[#allocation5 + $0x40] sm:$0xff]
    %v85 = vld [vmem:[#allocation5 + $0x48] sm:$0xff]
    %v86 = vld [vmem:[#allocation5 + $0x50] sm:$0xff]
    %v87 = vld [vmem:[#allocation5 + $0x58] sm:$0xff]
    %v88 = vld [vmem:[#allocation5 + $0x60] sm:$0xff]
    %v89 = vld [vmem:[#allocation5 + $0x68] sm:$0xff]
    %v90 = vld [vmem:[#allocation5 + $0x70] sm:$0xff]
    %v91 = vld [vmem:[#allocation5 + $0x78] sm:$0xff]
    %v92 = vld [vmem:[#allocation5 + $0x80] sm:$0xff]
    %v93 = vld [vmem:[#allocation5 + $0x88] sm:$0xff]
    %v94 = vld [vmem:[#allocation5 + $0x90] sm:$0xff]
    %v95 = vld [vmem:[#allocation5 + $0x98] sm:$0xff]
    %v96 = vld [vmem:[#allocation5 + $0xa0] sm:$0xff]
    %v97 = vld [vmem:[#allocation5 + $0xa8] sm:$0xff]
    %v98 = vld [vmem:[#allocation5 + $0xb0] sm:$0xff]
    %v99 = vld [vmem:[#allocation5 + $0xb8] sm:$0xff]
    %v100 = vld [vmem:[#allocation5 + $0xc0] sm:$0xff]
    %v101 = vld [vmem:[#allocation5 + $0xc8] sm:$0xff]
    %v102 = vld [vmem:[#allocation5 + $0xd0] sm:$0xff]
    %v103 = vld [vmem:[#allocation5 + $0xd8] sm:$0xff]
    %v104 = vld [vmem:[#allocation5 + $0xe0] sm:$0xff]
    %v105 = vld [vmem:[#allocation5 + $0xe8] sm:$0xff]
    %v106 = vld [vmem:[#allocation5 + $0xf0] sm:$0xff]
    %v107 = vld [vmem:[#allocation5 + $0xf8] sm:$0xff]
    %v108 = vld [vmem:[#allocation5 + $0x100] sm:$0xff]
    %v109 = vld [vmem:[#allocation5 + $0x108] sm:$0xff]
    %v110 = vld [vmem:[#allocation5 + $0x110] sm:$0xff]
    %v111 = vld [vmem:[#allocation5 + $0x118] sm:$0xff]
    %v112 = vld [vmem:[#allocation5 + $0x120] sm:$0xff]
    %v113 = vld [vmem:[#allocation5 + $0x128] sm:$0xff]
    %v114 = vld [vmem:[#allocation5 + $0x130] sm:$0xff]
    %v115 = vld [vmem:[#allocation5 + $0x138] sm:$0xff]
    %v116 = vld [vmem:[#allocation5 + $0x140] sm:$0xff]
    %v117 = vld [vmem:[#allocation5 + $0x148] sm:$0xff]
    %v118 = vld [vmem:[#allocation5 + $0x150] sm:$0xff]
    %v119 = vld [vmem:[#allocation5 + $0x158] sm:$0xff]
    %v120 = vld [vmem:[#allocation5 + $0x160] sm:$0xff]
    %v121 = vld [vmem:[#allocation5 + $0x168] sm:$0xff]
    %v122 = vld [vmem:[#allocation5 + $0x170] sm:$0xff]
    %v123 = vld [vmem:[#allocation5 + $0x178] sm:$0xff]
    %v124 = vld [vmem:[#allocation5 + $0x180] sm:$0xff]
    %v125 = vld [vmem:[#allocation5 + $0x188] sm:$0xff]
    %v126 = vld [vmem:[#allocation5 + $0x190] sm:$0xff]
    %v127 = vld [vmem:[#allocation5 + $0x198] sm:$0xff]
    %v128 = vld [vmem:[#allocation5 + $0x1a0] sm:$0xff]
    %v129 = vld [vmem:[#allocation5 + $0x1a8] sm:$0xff]
    %v130 = vld [vmem:[#allocation5 + $0x1b0] sm:$0xff]
    %v131 = vld [vmem:[#allocation5 + $0x1b8] sm:$0xff]
    %v132 = vld [vmem:[#allocation5 + $0x1c0] sm:$0xff]
    %v133 = vld [vmem:[#allocation5 + $0x1c8] sm:$0xff]
    %v134 = vld [vmem:[#allocation5 + $0x1d0] sm:$0xff]
    %v135 = vld [vmem:[#allocation5 + $0x1d8] sm:$0xff]
    %v136 = vld [vmem:[#allocation5 + $0x1e0] sm:$0xff]
    %v137 = vld [vmem:[#allocation5 + $0x1e8] sm:$0xff]
    %v138 = vld [vmem:[#allocation5 + $0x1f0] sm:$0xff]
    %v139 = vld [vmem:[#allocation5 + $0x1f8] sm:$0xff]
    %v140 = vld [vmem:[#allocation7] sm:$0xf]
    %v142 = vlaneseq
    %v143 = vshrl.u32 %v142, 7
    %v144 = vsub.s32 0, %v143
    %v145 = vrot.slane %v140, %v144
    %v146 = vlaneseq
    %v147 = vshrl.u32 %v146, 7
    %v148 = vsub.s32 1, %v147
    %v149 = vrot.slane %v140, %v148
    %v150 = vlaneseq
    %v151 = vshrl.u32 %v150, 7
    %v152 = vsub.s32 2, %v151
    %v153 = vrot.slane %v140, %v152
    %v154 = vlaneseq
    %v155 = vshrl.u32 %v154, 7
    %v156 = vsub.s32 3, %v155
    %v157 = vrot.slane %v140, %v156
    %162 = vmatprep.subr.mxu0 %v137
    %163 = vmatpush1.msra.mxu0 %v136
    %164 = vmatprep.subr.mxu0 %v133
    %165 = vmatpush1.msra.mxu0 %v132
    %166 = vmatprep.subr.mxu0 %v129
    %167 = vmatpush1.msra.mxu0 %v128
    %168 = vmatprep.subr.mxu0 %v125
    %169 = vmatpush1.msra.mxu0 %v124
    %170 = vmatprep.subr.mxu0 %v121
    %171 = vmatpush1.msra.mxu0 %v120
    %172 = vmatprep.subr.mxu0 %v117
    %173 = vmatpush1.msra.mxu0 %v116
    %174 = vmatprep.subr.mxu0 %v113
    %175 = vmatpush1.msra.mxu0 %v112
    %176 = vmatprep.subr.mxu0 %v109
    %177 = vmatpush1.msra.mxu0 %v108
    %178 = vmatprep.subr.mxu0 %v105
    %179 = vmatpush1.msra.mxu0 %v104
    %180 = vmatprep.subr.mxu0 %v101
    %181 = vmatpush1.msra.mxu0 %v100
    %182 = vmatprep.subr.mxu0 %v97
    %183 = vmatpush1.msra.mxu0 %v96
    %184 = vmatprep.subr.mxu0 %v93
    %185 = vmatpush1.msra.mxu0 %v92
    %186 = vmatprep.subr.mxu0 %v89
    %187 = vmatpush1.msra.mxu0 %v88
    %188 = vmatprep.subr.mxu0 %v85
    %189 = vmatpush1.msra.mxu0 %v84
    %190 = vmatprep.subr.mxu0 %v81
    %191 = vmatpush1.msra.mxu0 %v80
    %192 = vmatprep.subr.mxu0 %v77
    %193 = vmatpush1.msra.mxu0 %v76
    %194 = vmatprep.subr.mxu0 0.0
    %195 = vmatpush2.msra.mxu0 0.0
    %196 = vmatprep.subr.mxu0 0.0
    %197 = vmatpush2.msra.mxu0 0.0
    %198 = vmatprep.subr.mxu0 0.0
    %199 = vmatpush2.msra.mxu0 0.0
    %200 = vmatprep.subr.mxu0 0.0
    %201 = vmatpush2.msra.mxu0 0.0
    %202 = vmatprep.subr.mxu0 0.0
    %203 = vmatpush2.msra.mxu0 0.0
    %204 = vmatprep.subr.mxu0 0.0
    %205 = vmatpush2.msra.mxu0 0.0
    %206 = vmatprep.subr.mxu0 0.0
    %207 = vmatpush2.msra.mxu0 0.0
    %208 = vmatprep.subr.mxu0 0.0
    %209 = vmatpush2.msra.mxu0 0.0
    %210 = vmatprep.subr.mxu0 0.0
    %211 = vmatpush2.msra.mxu0 0.0
    %212 = vmatprep.subr.mxu0 0.0
    %213 = vmatpush2.msra.mxu0 0.0
    %214 = vmatprep.subr.mxu0 0.0
    %215 = vmatpush2.msra.mxu0 0.0
    %216 = vmatprep.subr.mxu0 0.0
    %217 = vmatpush2.msra.mxu0 0.0
    %218 = vmatprep.subr.mxu0 0.0
    %219 = vmatpush2.msra.mxu0 0.0
    %220 = vmatprep.subr.mxu0 0.0
    %221 = vmatpush2.msra.mxu0 0.0
    %222 = vmatprep.subr.mxu0 0.0
    %223 = vmatpush2.msra.mxu0 0.0
    %224 = vmatprep.subr.mxu0 0.0
    %225 = vmatpush2.msra.mxu0 0.0
    %226 = vmatprep.mubr.f32.mxu0 0.0
    %227 = vmatmul.mubr.f32.gmra.mxu0 %v74
    %v228 = vpop.f32.mrf.mxu0
    %v229 = vadd.f32 %v145, %v228
    %v230 = vpop.f32.mrf.mxu0
    %v231 = vadd.f32 %v149, %v230
    %232 = vmatprep.mubr.f32.mxu0 0.0
    %233 = vmatmul.mubr.f32.gmra.mxu0 %v75
    %v234 = vpop.f32.mrf.mxu0
    %v235 = vadd.f32 %v145, %v234
    %v236 = vpop.f32.mrf.mxu0
    %v237 = vadd.f32 %v149, %v236
    %238 = vdwg.mxu0
    %239 = vmatprep.subr.mxu0 %v139
    %240 = vmatpush1.msra.mxu0 %v138
    %241 = vmatprep.subr.mxu0 %v135
    %242 = vmatpush1.msra.mxu0 %v134
    %243 = vmatprep.subr.mxu0 %v131
    %244 = vmatpush1.msra.mxu0 %v130
    %245 = vmatprep.subr.mxu0 %v127
    %246 = vmatpush1.msra.mxu0 %v126
    %247 = vmatprep.subr.mxu0 %v123
    %248 = vmatpush1.msra.mxu0 %v122
    %249 = vmatprep.subr.mxu0 %v119
    %250 = vmatpush1.msra.mxu0 %v118
    %251 = vmatprep.subr.mxu0 %v115
    %252 = vmatpush1.msra.mxu0 %v114
    %253 = vmatprep.subr.mxu0 %v111
    %254 = vmatpush1.msra.mxu0 %v110
    %255 = vmatprep.subr.mxu0 %v107
    %256 = vmatpush1.msra.mxu0 %v106
    %257 = vmatprep.subr.mxu0 %v103
    %258 = vmatpush1.msra.mxu0 %v102
    %259 = vmatprep.subr.mxu0 %v99
    %260 = vmatpush1.msra.mxu0 %v98
    %261 = vmatprep.subr.mxu0 %v95
    %262 = vmatpush1.msra.mxu0 %v94
    %263 = vmatprep.subr.mxu0 %v91
    %264 = vmatpush1.msra.mxu0 %v90
    %265 = vmatprep.subr.mxu0 %v87
    %266 = vmatpush1.msra.mxu0 %v86
    %267 = vmatprep.subr.mxu0 %v83
    %268 = vmatpush1.msra.mxu0 %v82
    %269 = vmatprep.subr.mxu0 %v79
    %270 = vmatpush1.msra.mxu0 %v78
    %271 = vmatprep.subr.mxu0 0.0
    %272 = vmatpush2.msra.mxu0 0.0
    %273 = vmatprep.subr.mxu0 0.0
    %274 = vmatpush2.msra.mxu0 0.0
    %275 = vmatprep.subr.mxu0 0.0
    %276 = vmatpush2.msra.mxu0 0.0
    %277 = vmatprep.subr.mxu0 0.0
    %278 = vmatpush2.msra.mxu0 0.0
    %279 = vmatprep.subr.mxu0 0.0
    %280 = vmatpush2.msra.mxu0 0.0
    %281 = vmatprep.subr.mxu0 0.0
    %282 = vmatpush2.msra.mxu0 0.0
    %283 = vmatprep.subr.mxu0 0.0
    %284 = vmatpush2.msra.mxu0 0.0
    %285 = vmatprep.subr.mxu0 0.0
    %286 = vmatpush2.msra.mxu0 0.0
    %287 = vmatprep.subr.mxu0 0.0
    %288 = vmatpush2.msra.mxu0 0.0
    %289 = vmatprep.subr.mxu0 0.0
    %290 = vmatpush2.msra.mxu0 0.0
    %291 = vmatprep.subr.mxu0 0.0
    %292 = vmatpush2.msra.mxu0 0.0
    %293 = vmatprep.subr.mxu0 0.0
    %294 = vmatpush2.msra.mxu0 0.0
    %295 = vmatprep.subr.mxu0 0.0
    %296 = vmatpush2.msra.mxu0 0.0
    %297 = vmatprep.subr.mxu0 0.0
    %298 = vmatpush2.msra.mxu0 0.0
    %299 = vmatprep.subr.mxu0 0.0
    %300 = vmatpush2.msra.mxu0 0.0
    %301 = vmatprep.subr.mxu0 0.0
    %302 = vmatpush2.msra.mxu0 0.0
    %303 = vmatprep.mubr.f32.mxu0 0.0
    %304 = vmatmul.mubr.f32.gmra.mxu0 %v74
    %v305 = vpop.f32.mrf.mxu0
    %v306 = vadd.f32 %v153, %v305
    %v307 = vpop.f32.mrf.mxu0
    %v308 = vadd.f32 %v157, %v307
    %309 = vmatprep.mubr.f32.mxu0 0.0
    %310 = vmatmul.mubr.f32.gmra.mxu0 %v75
    %v311 = vpop.f32.mrf.mxu0
    %v312 = vadd.f32 %v153, %v311
    %v313 = vpop.f32.mrf.mxu0
    %v314 = vadd.f32 %v157, %v313
    %315 = vdwg.mxu0
    %v316 = vmul.f32 %v229, 0.5
    %v317 = vmul.f32 %v231, 0.5
    %v318 = vmul.f32 %v306, 0.5
    %v319 = vmul.f32 %v308, 0.5
    %v320 = vmul.f32 %v235, 0.5
    %v321 = vmul.f32 %v237, 0.5
    %v322 = vmul.f32 %v312, 0.5
    %v323 = vmul.f32 %v314, 0.5
    %v324 = vmul.f32 %v229, %v229
    %v325 = vmul.f32 %v231, %v231
    %v326 = vmul.f32 %v306, %v306
    %v327 = vmul.f32 %v308, %v308
    %v328 = vmul.f32 %v235, %v235
    %v329 = vmul.f32 %v237, %v237
    %v330 = vmul.f32 %v312, %v312
    %v331 = vmul.f32 %v314, %v314
    %v332 = vmul.f32 %v324, %v229
    %v333 = vmul.f32 %v325, %v231
    %v334 = vmul.f32 %v326, %v306
    %v335 = vmul.f32 %v327, %v308
    %v336 = vmul.f32 %v328, %v235
    %v337 = vmul.f32 %v329, %v237
    %v338 = vmul.f32 %v330, %v312
    %v339 = vmul.f32 %v331, %v314
    %v340 = vmul.f32 %v332, 0.044715
    %v341 = vmul.f32 %v333, 0.044715
    %v342 = vmul.f32 %v334, 0.044715
    %v343 = vmul.f32 %v335, 0.044715
    %v344 = vmul.f32 %v336, 0.044715
    %v345 = vmul.f32 %v337, 0.044715
    %v346 = vmul.f32 %v338, 0.044715
    %v347 = vmul.f32 %v339, 0.044715
    %v348 = vadd.f32 %v229, %v340
    %v349 = vadd.f32 %v231, %v341
    %v350 = vadd.f32 %v306, %v342
    %v351 = vadd.f32 %v308, %v343
    %v352 = vadd.f32 %v235, %v344
    %v353 = vadd.f32 %v237, %v345
    %v354 = vadd.f32 %v312, %v346
    %v355 = vadd.f32 %v314, %v347
    %v356 = vmul.f32 %v348, 0.7978846
    %v357 = vmul.f32 %v349, 0.7978846
    %v358 = vmul.f32 %v350, 0.7978846
    %v359 = vmul.f32 %v351, 0.7978846
    %v360 = vmul.f32 %v352, 0.7978846
    %v361 = vmul.f32 %v353, 0.7978846
    %v362 = vmul.f32 %v354, 0.7978846
    %v363 = vmul.f32 %v355, 0.7978846
    %v364 = vtanh.pop %v356
    %v365 = vtanh.pop %v357
    %v366 = vtanh.pop %v358
    %v367 = vtanh.pop %v359
    %v368 = vtanh.pop %v360
    %v369 = vtanh.pop %v361
    %v370 = vtanh.pop %v362
    %v371 = vtanh.pop %v363
    %v372 = vadd.f32 %v364, 1.0
    %v373 = vadd.f32 %v365, 1.0
    %v374 = vadd.f32 %v366, 1.0
    %v375 = vadd.f32 %v367, 1.0
    %v376 = vadd.f32 %v368, 1.0
    %v377 = vadd.f32 %v369, 1.0
    %v378 = vadd.f32 %v370, 1.0
    %v379 = vadd.f32 %v371, 1.0
    %v380 = vmul.f32 %v316, %v372
    %v381 = vmul.f32 %v317, %v373
    %v382 = vmul.f32 %v318, %v374
    %v383 = vmul.f32 %v319, %v375
    %v384 = vmul.f32 %v320, %v376
    %v385 = vmul.f32 %v321, %v377
    %v386 = vmul.f32 %v322, %v378
    %v387 = vmul.f32 %v323, %v379
    %v388 = vld [vmem:[#allocation8] sm:$0xff]
    %v389 = vld [vmem:[#allocation8 + $0x8] sm:$0xff]
    %v390 = vld [vmem:[#allocation8 + $0x10] sm:$0xff]
    %v391 = vld [vmem:[#allocation8 + $0x18] sm:$0xff]
    %v392 = vld [vmem:[#allocation8 + $0x20] sm:$0xff]
    %v393 = vld [vmem:[#allocation8 + $0x28] sm:$0xff]
    %v394 = vld [vmem:[#allocation8 + $0x30] sm:$0xff]
    %v395 = vld [vmem:[#allocation8 + $0x38] sm:$0xff]
    %v396 = vld [vmem:[#allocation8 + $0x40] sm:$0xff]
    %v397 = vld [vmem:[#allocation8 + $0x48] sm:$0xff]
    %v398 = vld [vmem:[#allocation8 + $0x50] sm:$0xff]
    %v399 = vld [vmem:[#allocation8 + $0x58] sm:$0xff]
    %v400 = vld [vmem:[#allocation8 + $0x60] sm:$0xff]
    %v401 = vld [vmem:[#allocation8 + $0x68] sm:$0xff]
    %v402 = vld [vmem:[#allocation8 + $0x70] sm:$0xff]
    %v403 = vld [vmem:[#allocation8 + $0x78] sm:$0xff]
    %v404 = vld [vmem:[#allocation8 + $0x80] sm:$0xff]
    %v405 = vld [vmem:[#allocation8 + $0x88] sm:$0xff]
    %v406 = vld [vmem:[#allocation8 + $0x90] sm:$0xff]
    %v407 = vld [vmem:[#allocation8 + $0x98] sm:$0xff]
    %v408 = vld [vmem:[#allocation8 + $0xa0] sm:$0xff]
    %v409 = vld [vmem:[#allocation8 + $0xa8] sm:$0xff]
    %v410 = vld [vmem:[#allocation8 + $0xb0] sm:$0xff]
    %v411 = vld [vmem:[#allocation8 + $0xb8] sm:$0xff]
    %v412 = vld [vmem:[#allocation8 + $0xc0] sm:$0xff]
    %v413 = vld [vmem:[#allocation8 + $0xc8] sm:$0xff]
    %v414 = vld [vmem:[#allocation8 + $0xd0] sm:$0xff]
    %v415 = vld [vmem:[#allocation8 + $0xd8] sm:$0xff]
    %v416 = vld [vmem:[#allocation8 + $0xe0] sm:$0xff]
    %v417 = vld [vmem:[#allocation8 + $0xe8] sm:$0xff]
    %v418 = vld [vmem:[#allocation8 + $0xf0] sm:$0xff]
    %v419 = vld [vmem:[#allocation8 + $0xf8] sm:$0xff]
    %v420 = vld [vmem:[#allocation8 + $0x100] sm:$0xff]
    %v421 = vld [vmem:[#allocation8 + $0x108] sm:$0xff]
    %v422 = vld [vmem:[#allocation8 + $0x110] sm:$0xff]
    %v423 = vld [vmem:[#allocation8 + $0x118] sm:$0xff]
    %v424 = vld [vmem:[#allocation8 + $0x120] sm:$0xff]
    %v425 = vld [vmem:[#allocation8 + $0x128] sm:$0xff]
    %v426 = vld [vmem:[#allocation8 + $0x130] sm:$0xff]
    %v427 = vld [vmem:[#allocation8 + $0x138] sm:$0xff]
    %v428 = vld [vmem:[#allocation8 + $0x140] sm:$0xff]
    %v429 = vld [vmem:[#allocation8 + $0x148] sm:$0xff]
    %v430 = vld [vmem:[#allocation8 + $0x150] sm:$0xff]
    %v431 = vld [vmem:[#allocation8 + $0x158] sm:$0xff]
    %v432 = vld [vmem:[#allocation8 + $0x160] sm:$0xff]
    %v433 = vld [vmem:[#allocation8 + $0x168] sm:$0xff]
    %v434 = vld [vmem:[#allocation8 + $0x170] sm:$0xff]
    %v435 = vld [vmem:[#allocation8 + $0x178] sm:$0xff]
    %v436 = vld [vmem:[#allocation8 + $0x180] sm:$0xff]
    %v437 = vld [vmem:[#allocation8 + $0x188] sm:$0xff]
    %v438 = vld [vmem:[#allocation8 + $0x190] sm:$0xff]
    %v439 = vld [vmem:[#allocation8 + $0x198] sm:$0xff]
    %v440 = vld [vmem:[#allocation8 + $0x1a0] sm:$0xff]
    %v441 = vld [vmem:[#allocation8 + $0x1a8] sm:$0xff]
    %v442 = vld [vmem:[#allocation8 + $0x1b0] sm:$0xff]
    %v443 = vld [vmem:[#allocation8 + $0x1b8] sm:$0xff]
    %v444 = vld [vmem:[#allocation8 + $0x1c0] sm:$0xff]
    %v445 = vld [vmem:[#allocation8 + $0x1c8] sm:$0xff]
    %v446 = vld [vmem:[#allocation8 + $0x1d0] sm:$0xff]
    %v447 = vld [vmem:[#allocation8 + $0x1d8] sm:$0xff]
    %v448 = vld [vmem:[#allocation8 + $0x1e0] sm:$0xff]
    %v449 = vld [vmem:[#allocation8 + $0x1e8] sm:$0xff]
    %v450 = vld [vmem:[#allocation8 + $0x1f0] sm:$0xff]
    %v451 = vld [vmem:[#allocation8 + $0x1f8] sm:$0xff]
    %v452 = vld [vmem:[%s4] sm:$0x1]
    %v454 = vlaneseq
    %v455 = vshrl.u32 %v454, 7
    %v456 = vsub.s32 0, %v455
    %v457 = vrot.slane %v452, %v456
    %459 = vmatprep.subr.mxu0 0.0
    %460 = vmatpush1.msra.mxu0 %v403
    %461 = vmatprep.subr.mxu0 0.0
    %462 = vmatpush1.msra.mxu0 %v402
    %463 = vmatprep.subr.mxu0 0.0
    %464 = vmatpush1.msra.mxu0 %v401
    %465 = vmatprep.subr.mxu0 0.0
    %466 = vmatpush1.msra.mxu0 %v400
    %467 = vmatprep.subr.mxu0 0.0
    %468 = vmatpush1.msra.mxu0 %v399
    %469 = vmatprep.subr.mxu0 0.0
    %470 = vmatpush1.msra.mxu0 %v398
    %471 = vmatprep.subr.mxu0 0.0
    %472 = vmatpush1.msra.mxu0 %v397
    %473 = vmatprep.subr.mxu0 0.0
    %474 = vmatpush1.msra.mxu0 %v396
    %475 = vmatprep.subr.mxu0 0.0
    %476 = vmatpush1.msra.mxu0 %v395
    %477 = vmatprep.subr.mxu0 0.0
    %478 = vmatpush1.msra.mxu0 %v394
    %479 = vmatprep.subr.mxu0 0.0
    %480 = vmatpush1.msra.mxu0 %v393
    %481 = vmatprep.subr.mxu0 0.0
    %482 = vmatpush1.msra.mxu0 %v392
    %483 = vmatprep.subr.mxu0 0.0
    %484 = vmatpush1.msra.mxu0 %v391
    %485 = vmatprep.subr.mxu0 0.0
    %486 = vmatpush1.msra.mxu0 %v390
    %487 = vmatprep.subr.mxu0 0.0
    %488 = vmatpush1.msra.mxu0 %v389
    %489 = vmatprep.subr.mxu0 0.0
    %490 = vmatpush1.msra.mxu0 %v388
    %491 = vmatprep.subr.mxu0 0.0
    %492 = vmatpush2.msra.mxu0 %v419
    %493 = vmatprep.subr.mxu0 0.0
    %494 = vmatpush2.msra.mxu0 %v418
    %495 = vmatprep.subr.mxu0 0.0
    %496 = vmatpush2.msra.mxu0 %v417
    %497 = vmatprep.subr.mxu0 0.0
    %498 = vmatpush2.msra.mxu0 %v416
    %499 = vmatprep.subr.mxu0 0.0
    %500 = vmatpush2.msra.mxu0 %v415
    %501 = vmatprep.subr.mxu0 0.0
    %502 = vmatpush2.msra.mxu0 %v414
    %503 = vmatprep.subr.mxu0 0.0
    %504 = vmatpush2.msra.mxu0 %v413
    %505 = vmatprep.subr.mxu0 0.0
    %506 = vmatpush2.msra.mxu0 %v412
    %507 = vmatprep.subr.mxu0 0.0
    %508 = vmatpush2.msra.mxu0 %v411
    %509 = vmatprep.subr.mxu0 0.0
    %510 = vmatpush2.msra.mxu0 %v410
    %511 = vmatprep.subr.mxu0 0.0
    %512 = vmatpush2.msra.mxu0 %v409
    %513 = vmatprep.subr.mxu0 0.0
    %514 = vmatpush2.msra.mxu0 %v408
    %515 = vmatprep.subr.mxu0 0.0
    %516 = vmatpush2.msra.mxu0 %v407
    %517 = vmatprep.subr.mxu0 0.0
    %518 = vmatpush2.msra.mxu0 %v406
    %519 = vmatprep.subr.mxu0 0.0
    %520 = vmatpush2.msra.mxu0 %v405
    %521 = vmatprep.subr.mxu0 0.0
    %522 = vmatpush2.msra.mxu0 %v404
    %523 = vmatprep.mubr.f32.mxu0 %v381
    %524 = vmatmul.mubr.f32.gmra.mxu0 %v380
    %v525 = vpop.f32.mrf.mxu0
    %v526 = vadd.f32 %v457, %v525
    %v527 = vpop.f32.mrf.mxu0
    %528 = vmatprep.mubr.f32.mxu0 %v385
    %529 = vmatmul.mubr.f32.gmra.mxu0 %v384
    %v530 = vpop.f32.mrf.mxu0
    %v531 = vadd.f32 %v457, %v530
    %v532 = vpop.f32.mrf.mxu0
    %533 = vdwg.mxu0
    %534 = vmatprep.subr.mxu0 0.0
    %535 = vmatpush1.msra.mxu0 %v435
    %536 = vmatprep.subr.mxu0 0.0
    %537 = vmatpush1.msra.mxu0 %v434
    %538 = vmatprep.subr.mxu0 0.0
    %539 = vmatpush1.msra.mxu0 %v433
    %540 = vmatprep.subr.mxu0 0.0
    %541 = vmatpush1.msra.mxu0 %v432
    %542 = vmatprep.subr.mxu0 0.0
    %543 = vmatpush1.msra.mxu0 %v431
    %544 = vmatprep.subr.mxu0 0.0
    %545 = vmatpush1.msra.mxu0 %v430
    %546 = vmatprep.subr.mxu0 0.0
    %547 = vmatpush1.msra.mxu0 %v429
    %548 = vmatprep.subr.mxu0 0.0
    %549 = vmatpush1.msra.mxu0 %v428
    %550 = vmatprep.subr.mxu0 0.0
    %551 = vmatpush1.msra.mxu0 %v427
    %552 = vmatprep.subr.mxu0 0.0
    %553 = vmatpush1.msra.mxu0 %v426
    %554 = vmatprep.subr.mxu0 0.0
    %555 = vmatpush1.msra.mxu0 %v425
    %556 = vmatprep.subr.mxu0 0.0
    %557 = vmatpush1.msra.mxu0 %v424
    %558 = vmatprep.subr.mxu0 0.0
    %559 = vmatpush1.msra.mxu0 %v423
    %560 = vmatprep.subr.mxu0 0.0
    %561 = vmatpush1.msra.mxu0 %v422
    %562 = vmatprep.subr.mxu0 0.0
    %563 = vmatpush1.msra.mxu0 %v421
    %564 = vmatprep.subr.mxu0 0.0
    %565 = vmatpush1.msra.mxu0 %v420
    %566 = vmatprep.subr.mxu0 0.0
    %567 = vmatpush2.msra.mxu0 %v451
    %568 = vmatprep.subr.mxu0 0.0
    %569 = vmatpush2.msra.mxu0 %v450
    %570 = vmatprep.subr.mxu0 0.0
    %571 = vmatpush2.msra.mxu0 %v449
    %572 = vmatprep.subr.mxu0 0.0
    %573 = vmatpush2.msra.mxu0 %v448
    %574 = vmatprep.subr.mxu0 0.0
    %575 = vmatpush2.msra.mxu0 %v447
    %576 = vmatprep.subr.mxu0 0.0
    %577 = vmatpush2.msra.mxu0 %v446
    %578 = vmatprep.subr.mxu0 0.0
    %579 = vmatpush2.msra.mxu0 %v445
    %580 = vmatprep.subr.mxu0 0.0
    %581 = vmatpush2.msra.mxu0 %v444
    %582 = vmatprep.subr.mxu0 0.0
    %583 = vmatpush2.msra.mxu0 %v443
    %584 = vmatprep.subr.mxu0 0.0
    %585 = vmatpush2.msra.mxu0 %v442
    %586 = vmatprep.subr.mxu0 0.0
    %587 = vmatpush2.msra.mxu0 %v441
    %588 = vmatprep.subr.mxu0 0.0
    %589 = vmatpush2.msra.mxu0 %v440
    %590 = vmatprep.subr.mxu0 0.0
    %591 = vmatpush2.msra.mxu0 %v439
    %592 = vmatprep.subr.mxu0 0.0
    %593 = vmatpush2.msra.mxu0 %v438
    %594 = vmatprep.subr.mxu0 0.0
    %595 = vmatpush2.msra.mxu0 %v437
    %596 = vmatprep.subr.mxu0 0.0
    %597 = vmatpush2.msra.mxu0 %v436
    %598 = vmatprep.mubr.f32.mxu0 %v383
    %599 = vmatmul.mubr.f32.gmra.mxu0 %v382
    %v600 = vpop.f32.mrf.mxu0
    %v601 = vadd.f32 %v526, %v600
    %v602 = vpop.f32.mrf.mxu0
    %603 = vmatprep.mubr.f32.mxu0 %v387
    %604 = vmatmul.mubr.f32.gmra.mxu0 %v386
    %v605 = vpop.f32.mrf.mxu0
    %v606 = vadd.f32 %v531, %v605
    %v607 = vpop.f32.mrf.mxu0
    %608 = vdwg.mxu0
    %609 = vst [vmem:[#allocation10] sm:$0xff] %v601
    %610 = vst [vmem:[#allocation10 + $0x8] sm:$0xff] %v606
    // Predicated region
    $region38: #{tpu_custom_call.1} parent=1 // pred_check
      _
    $region39: #{tpu_custom_call.1} parent=1 // pred_check_branch
      %612 = sbr.rel (0) target = $region41
    $region40: #{tpu_custom_call.1} parent=1 // pred_region
      %s614 = ssub.s32 256, 256
      %615 = vsyncadd [#allocation4], %s614
      %s616 = sshll.u32 [#allocation10], 4
      %s617 = int_to_ptr.vmem [resolvable:$true] %s616
      %622 = dma.vmem_to_hbm [thread:$0]  %s617, 256, %s5, [#allocation4], 128, 128, 8
    $region41: #{tpu_custom_call.1} parent=1 // pred_fallthru
      _
    // Predicated region
    $region42: #{tpu_custom_call.1} parent=1 // pred_check
      _
    $region43: #{tpu_custom_call.1} parent=1 // pred_check_branch
      %624 = sbr.rel (0) target = $region45
    $region44: #{tpu_custom_call.1} parent=1 // pred_region
      %625 = dma.done [#allocation4], 256
    $region45: #{tpu_custom_call.1} parent=1 // pred_fallthru
      _
    %626 = vsyncpa [#allocation3], 1
    %627 = vsyncpa [#allocation6], 1
    %628 = vsyncpa [#allocation9], 1
    %629 = vsyncpa [#allocation4], 1

</llo_original>
